<compile_context>
chip_gen: v5e
topology: v5e:2x2
jax: 0.10.0
libtpu: 0.0.40
codegen_flags: <defaults>
</compile_context>

<pallas_src>
import jax
import jax.numpy as jnp
from jax.experimental import pallas as pl
from jax.experimental.pallas import tpu as pltpu


def simple_attn_kernel(full_ref, last_ref, w1_ref, w2_ref, b_ref, v_ref, out_ref):
    full = full_ref[...]                                    # (BB, S, D) f32
    BB, S, D = full.shape

    # --- Projections on the MXU (bf16 operands, f32 accumulation) ----------
    # One 2D matmul: the (BB*S, D) LHS fills the MXU M dimension; the reshape
    # is a layout no-op (merges leading dims, D stays on lanes).
    full2d = full.reshape(BB * S, D).astype(jnp.bfloat16)
    h2 = jnp.dot(full2d, w2_ref[...],
                 preferred_element_type=jnp.float32).reshape(BB, S, D)

    # Small `last` projection; folded bias added on the (BB, D) tensor only.
    h1 = jnp.dot(last_ref[...].astype(jnp.bfloat16), w1_ref[...],
                 preferred_element_type=jnp.float32) + b_ref[...]          # (BB, D)

    h = jnp.tanh(h2 + h1[:, None, :])                       # (BB, S, D), f32 EUP
    # TODO(synk): for small D this kernel is EUP-bound on the tanh; on v6e/v7x a
    # bf16 tanh (packed EUP) would ~halve that cost if the accuracy budget allows.

    # --- Score / softmax over the sequence axis -----------------------------
    # V projection as VPU multiply + lane reduce (no width-1 MXU matmul); V's
    # bias is omitted because softmax(score + c) == softmax(score).
    score = jnp.sum(h * v_ref[...], axis=-1)                # (BB, S), dense vregs

    m = jnp.max(score, axis=-1, keepdims=True)
    e = jnp.exp(score - m)
    attn = e / jnp.sum(e, axis=-1, keepdims=True)           # exact denom (cheap)

    # --- Attention-weighted sum over the sequence ---------------------------
    out_ref[...] = jnp.sum(attn[:, :, None] * full, axis=1).astype(out_ref.dtype)


def _vmem_capacity_bytes():
    try:
        return int(pltpu.get_tpu_info().vmem_capacity_bytes)
    except Exception:
        return 64 << 20            # conservative fallback: v7x per-core VMEM


def _pick_batch_block(B, S, D, budget_bytes):
    """Largest batch block whose per-step working set fits the VMEM budget."""
    # Fixed cost: bf16 W1/W2 (double-buffered by default) + f32 bias / V rows.
    fixed = 2 * (2 * D * D * 2) + 4 * (D * 4)
    # Per batch row: double-buffered f32 `full` block, last/out blocks, and
    # in-kernel temporaries (bf16 copy of full, h2, h) ~= 4.5x S*D f32.
    per_b = int(4.5 * S * D * 4) + 16 * D * 4
    fit = max(1, (budget_bytes - fixed) // per_b)
    if B <= 8:
        return int(min(B, fit))     # tiny batch: single grid step if it fits
    # Keep >= 2 grid steps so v7x's two TensorCores both get work, and keep the
    # batch-block a multiple of 8 sublanes.
    bb = min(fit, pl.cdiv(B, 2))
    bb = max(8, 8 * (bb // 8))
    return int(bb)


def simple_attn(full, last, w1, b1, w2, b2, v, bv=None, *, batch_block=None):
    """full: (B, S, D) f32, last: (B, 1, D) f32.

    w1, w2: (D, D) stored as (in, out); v: (D, 1); biases b1, b2: (1, D).
    bv is accepted for API parity but unused (softmax-shift invariant).
    """
    del bv
    B, S, D = full.shape

    cap = _vmem_capacity_bytes()
    if batch_block is None:
        batch_block = _pick_batch_block(B, S, D, int(cap * 0.7))
    BB = int(batch_block)
    nb = pl.cdiv(B, BB)
    Bp = nb * BB

    # Parameter prep: fold the two biases, present V as an f32 row, cast the
    # MXU weights to bf16 once (halves weight DMA; accumulation stays f32).
    b = (b1 + b2).reshape(1, D).astype(jnp.float32)
    v_row = v.reshape(1, D).astype(jnp.float32)
    w1_bf16 = w1.astype(jnp.bfloat16)
    w2_bf16 = w2.astype(jnp.bfloat16)
    last2d = last.reshape(B, D)

    if Bp != B:
        # Zero padding is benign: constant score -> uniform softmax -> zero
        # context on padded rows, which are sliced off below.
        full = jnp.pad(full, ((0, Bp - B), (0, 0), (0, 0)))
        last2d = jnp.pad(last2d, ((0, Bp - B), (0, 0)))

    grid_spec = pltpu.PrefetchScalarGridSpec(
        num_scalar_prefetch=0,
        grid=(nb,),
        in_specs=[
            pl.BlockSpec((BB, S, D), lambda i: (i, 0, 0)),  # full
            pl.BlockSpec((BB, D), lambda i: (i, 0)),        # last (squeezed to 2D)
            pl.BlockSpec((D, D), lambda i: (0, 0)),         # W1 (in, out), bf16
            pl.BlockSpec((D, D), lambda i: (0, 0)),         # W2 (in, out), bf16
            pl.BlockSpec((1, D), lambda i: (0, 0)),         # b = b1 + b2
            pl.BlockSpec((1, D), lambda i: (0, 0)),         # V as a row
        ],
        # NOTE: at very large D the grid-invariant W/b/v specs could be
        # single-buffered (pipeline_mode=pl.Buffered(1)) to free more VMEM.
        out_specs=pl.BlockSpec((BB, D), lambda i: (i, 0)),
    )

    out = pl.pallas_call(
        simple_attn_kernel,
        out_shape=jax.ShapeDtypeStruct((Bp, D), full.dtype),
        grid_spec=grid_spec,
        compiler_params=pltpu.CompilerParams(
            dimension_semantics=("parallel",),
            # Raise the scoped-VMEM limit toward physical capacity so the
            # budgeted block size actually fits (v5e's default is only 16 MiB).
            vmem_limit_bytes=int(cap * 0.85),
        ),
    )(full, last2d, w1_bf16, w2_bf16, b, v_row)

    return out[:B] if Bp != B else out


def reference_attn(full, last, w1, b1, w2, b2, v, bv):
    # pure-JAX f32 reference of the PyTorch forward (weights already (in, out))
    h = jnp.tanh(last @ w1 + b1 + full @ w2 + b2)           # (B, S, D)
    score = h @ v + bv                                      # (B, S, 1)
    attn = jax.nn.softmax(score, axis=1)
    return jnp.sum(attn * full, axis=1)                     # (B, D)


if __name__ == "__main__":
    B, S, D = 2, 8, 32  # batch, seq len, in_shape

    key = jax.random.PRNGKey(0)
    k_full, k_last, k_w1, k_b1, k_w2, k_b2, k_v, k_bv = jax.random.split(key, 8)

    full = jax.random.normal(k_full, (B, S, D), dtype=jnp.float32)
    last = jax.random.normal(k_last, (B, 1, D), dtype=jnp.float32)

    # deterministic parameter init (PyTorch Linear shapes, stored pre-transposed)
    bound = 1.0 / (D ** 0.5)
    w1 = jax.random.uniform(k_w1, (D, D), jnp.float32, -bound, bound)   # (in, out)
    b1 = jax.random.uniform(k_b1, (1, D), jnp.float32, -bound, bound)
    w2 = jax.random.uniform(k_w2, (D, D), jnp.float32, -bound, bound)   # (in, out)
    b2 = jax.random.uniform(k_b2, (1, D), jnp.float32, -bound, bound)
    v  = jax.random.uniform(k_v,  (D, 1), jnp.float32, -bound, bound)   # (in, out)
    bv = jax.random.uniform(k_bv, (1, 1), jnp.float32, -bound, bound)

    out = simple_attn(full, last, w1, b1, w2, b2, v, bv)
    out = jax.block_until_ready(out)

    ref = reference_attn(full, last, w1, b1, w2, b2, v, bv)
    assert out.shape == (B, D)
    # Tolerance covers bf16 MXU operands (f32 accumulation); typical error is
    # well below 1e-3 at these magnitudes.
    assert jnp.allclose(out, ref, atol=1e-2, rtol=1e-2), \
        f"max abs err {jnp.max(jnp.abs(out - ref))}"

    # TODO(synk): lens-based masking path (score[~mask] = -inf) not implemented;
    # it would need lens as a scalar-prefetch arg + broadcasted_iota mask in-kernel.
    print("KERNEL_OK")
</pallas_src>

<mosaic_0001>
module attributes {stable_mosaic.version = 11 : i64} {
  func.func @simple_attn_kernel(%arg0: i32, %arg1: memref<2x8x32xf32, #tpu.memory_space<vmem>>, %arg2: memref<2x32xf32, #tpu.memory_space<vmem>>, %arg3: memref<32x32xbf16, #tpu.memory_space<vmem>>, %arg4: memref<32x32xbf16, #tpu.memory_space<vmem>>, %arg5: memref<1x32xf32, #tpu.memory_space<vmem>>, %arg6: memref<1x32xf32, #tpu.memory_space<vmem>>, %arg7: memref<2x32xf32, #tpu.memory_space<vmem>>) attributes {dimension_semantics = [#tpu.dimension_semantics<parallel>], iteration_bounds = array<i64: 1>, scalar_prefetch = 0 : i64, scratch_operands = 0 : i64, tpu.core_type = #tpu.core_type<tc>, window_params = [{transform_indices = @transform_0, window_bounds = array<i64: 2, 8, 32>}, {transform_indices = @transform_1, window_bounds = array<i64: 2, 32>}, {pipeline_mode = #tpu.pipeline_mode<synchronous>, transform_indices = @transform_2, window_bounds = array<i64: 32, 32>}, {pipeline_mode = #tpu.pipeline_mode<synchronous>, transform_indices = @transform_3, window_bounds = array<i64: 32, 32>}, {pipeline_mode = #tpu.pipeline_mode<synchronous>, transform_indices = @transform_4, window_bounds = array<i64: 1, 32>}, {pipeline_mode = #tpu.pipeline_mode<synchronous>, transform_indices = @transform_5, window_bounds = array<i64: 1, 32>}, {transform_indices = @transform_6, window_bounds = array<i64: 2, 32>}]} {
    %c0 = arith.constant 0 : index
    %c0_0 = arith.constant 0 : index
    %c0_1 = arith.constant 0 : index
    %0 = vector.load %arg1[%c0, %c0_0, %c0_1] : memref<2x8x32xf32, #tpu.memory_space<vmem>>, vector<2x8x32xf32>
    %1 = vector.shape_cast %0 : vector<2x8x32xf32> to vector<16x32xf32>
    %2 = arith.truncf %1 : vector<16x32xf32> to vector<16x32xbf16>
    %c0_2 = arith.constant 0 : index
    %c0_3 = arith.constant 0 : index
    %3 = vector.load %arg4[%c0_2, %c0_3] : memref<32x32xbf16, #tpu.memory_space<vmem>>, vector<32x32xbf16>
    %cst = arith.constant dense<0.000000e+00> : vector<16x32xf32>
    %4 = tpu.matmul %2, %3, %cst {dimension_numbers = #tpu.dot_dimension_numbers<[1], [0], [0], [1], [0, 0, 1, 1], [], []>} : vector<16x32xbf16>, vector<32x32xbf16>, vector<16x32xf32> -> vector<16x32xf32>
    %5 = vector.shape_cast %4 : vector<16x32xf32> to vector<2x8x32xf32>
    %c0_4 = arith.constant 0 : index
    %c0_5 = arith.constant 0 : index
    %6 = vector.load %arg2[%c0_4, %c0_5] : memref<2x32xf32, #tpu.memory_space<vmem>>, vector<2x32xf32>
    %7 = arith.truncf %6 : vector<2x32xf32> to vector<2x32xbf16>
    %c0_6 = arith.constant 0 : index
    %c0_7 = arith.constant 0 : index
    %8 = vector.load %arg3[%c0_6, %c0_7] : memref<32x32xbf16, #tpu.memory_space<vmem>>, vector<32x32xbf16>
    %cst_8 = arith.constant dense<0.000000e+00> : vector<2x32xf32>
    %9 = tpu.matmul %7, %8, %cst_8 {dimension_numbers = #tpu.dot_dimension_numbers<[1], [0], [0], [1], [0, 0, 1, 1], [], []>} : vector<2x32xbf16>, vector<32x32xbf16>, vector<2x32xf32> -> vector<2x32xf32>
    %c0_9 = arith.constant 0 : index
    %c0_10 = arith.constant 0 : index
    %10 = vector.load %arg5[%c0_9, %c0_10] : memref<1x32xf32, #tpu.memory_space<vmem>>, vector<1x32xf32>
    %11 = vector.broadcast %10 : vector<1x32xf32> to vector<2x32xf32>
    %12 = arith.addf %9, %11 : vector<2x32xf32>
    %13 = vector.shape_cast %12 : vector<2x32xf32> to vector<2x1x32xf32>
    %14 = vector.broadcast %13 : vector<2x1x32xf32> to vector<2x8x32xf32>
    %15 = arith.addf %5, %14 : vector<2x8x32xf32>
    %16 = math.tanh %15 : vector<2x8x32xf32>
    %c0_11 = arith.constant 0 : index
    %c0_12 = arith.constant 0 : index
    %17 = vector.load %arg6[%c0_11, %c0_12] : memref<1x32xf32, #tpu.memory_space<vmem>>, vector<1x32xf32>
    %18 = vector.shape_cast %17 : vector<1x32xf32> to vector<1x1x32xf32>
    %19 = vector.broadcast %18 : vector<1x1x32xf32> to vector<2x8x32xf32>
    %20 = arith.mulf %16, %19 : vector<2x8x32xf32>
    %cst_13 = arith.constant dense<0.000000e+00> : vector<2x8xf32>
    %21 = vector.multi_reduction <add>, %20, %cst_13 [2] : vector<2x8x32xf32> to vector<2x8xf32>
    %cst_14 = arith.constant dense<0xFF800000> : vector<2xf32>
    %22 = vector.multi_reduction <maximumf>, %21, %cst_14 [1] : vector<2x8xf32> to vector<2xf32>
    %23 = vector.shape_cast %22 : vector<2xf32> to vector<2x1xf32>
    %24 = vector.broadcast %23 : vector<2x1xf32> to vector<2x8xf32>
    %25 = arith.subf %21, %24 : vector<2x8xf32>
    %26 = math.exp %25 : vector<2x8xf32>
    %cst_15 = arith.constant dense<0.000000e+00> : vector<2xf32>
    %27 = vector.multi_reduction <add>, %26, %cst_15 [1] : vector<2x8xf32> to vector<2xf32>
    %28 = vector.shape_cast %27 : vector<2xf32> to vector<2x1xf32>
    %29 = vector.broadcast %28 : vector<2x1xf32> to vector<2x8xf32>
    %30 = arith.divf %26, %29 : vector<2x8xf32>
    %31 = vector.shape_cast %30 : vector<2x8xf32> to vector<2x8x1xf32>
    %32 = vector.broadcast %31 : vector<2x8x1xf32> to vector<2x8x32xf32>
    %33 = arith.mulf %32, %0 : vector<2x8x32xf32>
    %cst_16 = arith.constant dense<0.000000e+00> : vector<2x32xf32>
    %34 = vector.multi_reduction <add>, %33, %cst_16 [1] : vector<2x8x32xf32> to vector<2x32xf32>
    %c0_17 = arith.constant 0 : index
    %c0_18 = arith.constant 0 : index
    %35 = vector.load %arg7[%c0_17, %c0_18] : memref<2x32xf32, #tpu.memory_space<vmem>>, vector<2x32xf32>
    tpu.vector_store %arg7[%c0_17, %c0_18], %34 {strides = array<i32>} : memref<2x32xf32, #tpu.memory_space<vmem>>, vector<2x32xf32>,
    return
  }
  func.func @transform_0(%arg0: i32) -> (i32, i32, i32) {
    %c0_i32 = arith.constant 0 : i32
    %c0_i32_0 = arith.constant 0 : i32
    %c0_i32_1 = arith.constant 0 : i32
    return %arg0, %c0_i32, %c0_i32_0 : i32, i32, i32
  }
  func.func @transform_1(%arg0: i32) -> (i32, i32) {
    %c0_i32 = arith.constant 0 : i32
    %c0_i32_0 = arith.constant 0 : i32
    return %arg0, %c0_i32 : i32, i32
  }
  func.func @transform_2(%arg0: i32) -> (i32, i32) {
    %c0_i32 = arith.constant 0 : i32
    %c0_i32_0 = arith.constant 0 : i32
    %c0_i32_1 = arith.constant 0 : i32
    return %c0_i32, %c0_i32_0 : i32, i32
  }
  func.func @transform_3(%arg0: i32) -> (i32, i32) {
    %c0_i32 = arith.constant 0 : i32
    %c0_i32_0 = arith.constant 0 : i32
    %c0_i32_1 = arith.constant 0 : i32
    return %c0_i32, %c0_i32_0 : i32, i32
  }
  func.func @transform_4(%arg0: i32) -> (i32, i32) {
    %c0_i32 = arith.constant 0 : i32
    %c0_i32_0 = arith.constant 0 : i32
    %c0_i32_1 = arith.constant 0 : i32
    return %c0_i32, %c0_i32_0 : i32, i32
  }
  func.func @transform_5(%arg0: i32) -> (i32, i32) {
    %c0_i32 = arith.constant 0 : i32
    %c0_i32_0 = arith.constant 0 : i32
    %c0_i32_1 = arith.constant 0 : i32
    return %c0_i32, %c0_i32_0 : i32, i32
  }
  func.func @transform_6(%arg0: i32) -> (i32, i32) {
    %c0_i32 = arith.constant 0 : i32
    %c0_i32_0 = arith.constant 0 : i32
    return %arg0, %c0_i32 : i32, i32
  }
}

</mosaic_0001>

<llo_original>
// kernel: tpu_custom_call.1
$region0: #{tpu_custom_call.1}
  #allocation0 [shape = 'u32[]', space=smem, size = 0x4, offset = 0x4, fixed_abs, tag = 'smem constant byte address 0x4 - core index']
  #allocation1 [shape = 'u32[72,128]{1,0:T(1,128)}', space=vmem, size = 0x9000, scoped, tag = 'internal scratch']
  %s0 = inlined_call_operand.hbm [shape: f32[2,8,32], index: 0, kind: input, shape index: {}]
  %s1 = inlined_call_operand.hbm [shape: f32[2,32], index: 1, kind: input, shape index: {}]
  %s2 = inlined_call_operand.hbm [shape: bf16[32,32], index: 2, kind: input, shape index: {}]
  %s3 = inlined_call_operand.hbm [shape: bf16[32,32], index: 3, kind: input, shape index: {}]
  %s4 = inlined_call_operand.vmem [shape: f32[1,32], index: 4, kind: input, shape index: {}]
  %s5 = inlined_call_operand.vmem [shape: f32[1,32], index: 5, kind: input, shape index: {}]
  %s6 = inlined_call_operand.hbm [shape: f32[2,32], index: 6, kind: output, shape index: {}]
  %s7 = sld [smem:[#allocation0]]
  $region50: #{tpu_custom_call.1} parent=0
    _
  %s9 = ssub.s32 1, %s7
  %s10 = scalar_select 0, %s9, %s7
  $region1: #{tpu_custom_call.1} parent=0
    #allocation2 [shape = 'u8[8192]{0}', space=vmem, size = 0x2000, scoped, tag = 'input window, operand 0, single buffered']
    #allocation3 [shape = 's32[1]{0}', space=sflag, size = 0x4, scoped, tag = 'scoped memory for tpu_custom_call.1']
    #allocation4 [shape = 's32[1]{0}', space=sflag, size = 0x4, scoped, tag = 'scoped memory for tpu_custom_call.1']
    #allocation5 [shape = 'u8[1024]{0}', space=vmem, size = 0x400, scoped, tag = 'input window, operand 1, single buffered']
    #allocation6 [shape = 's32[1]{0}', space=sflag, size = 0x4, scoped, tag = 'scoped memory for tpu_custom_call.1']
    #allocation7 [shape = 'u8[8192]{0}', space=vmem, size = 0x2000, scoped, tag = 'input window, operand 2, single buffered']
    #allocation8 [shape = 'u8[8192]{0}', space=vmem, size = 0x2000, scoped, tag = 'input window, operand 3, single buffered']
    #allocation9 [shape = 's32[1]{0}', space=sflag, size = 0x4, scoped, tag = 'scoped memory for tpu_custom_call.1']
    #allocation10 [shape = 'u8[1024]{0}', space=vmem, size = 0x400, scoped, tag = 'output window, operand 0, single buffered']
    %11 = vsyncpa [#allocation3], 0
    %12 = vsyncpa [#allocation6], 0
    %13 = vsyncpa [#allocation9], 0
    %14 = vsyncpa [#allocation4], 0
    // Predicated region
    $region2: #{tpu_custom_call.1} parent=1 // pred_check
      _
    $region3: #{tpu_custom_call.1} parent=1 // pred_check_branch
      %16 = sbr.rel (0) target = $region5
    $region4: #{tpu_custom_call.1} parent=1 // pred_region
      %18 = vsyncadd [#allocation3], 0
      %s19 = sshll.u32 %s0, 4
      %s20 = int_to_ptr.hbm [resolvable:$true] %s19
      %s21 = sshll.u32 [#allocation2], 4
      %s22 = int_to_ptr.vmem [resolvable:$true] %s21
      %27 = dma.hbm_to_vmem [thread:$0]  %s20, 256, %s22, [#allocation3], 128, 128, 8
    $region5: #{tpu_custom_call.1} parent=1 // pred_fallthru
      _
    // Predicated region
    $region6: #{tpu_custom_call.1} parent=1 // pred_check
      _
    $region7: #{tpu_custom_call.1} parent=1 // pred_check_branch
      %29 = sbr.rel (0) target = $region9
    $region8: #{tpu_custom_call.1} parent=1 // pred_region
      %31 = vsyncadd [#allocation6], 0
      %s33 = sshll.u32 %s1, 4
      %s34 = int_to_ptr.hbm [resolvable:$true] %s33
      %s35 = sshll.u32 [#allocation5], 4
      %s36 = int_to_ptr.vmem [resolvable:$true] %s35
      %38 = dma.hbm_to_vmem [thread:$0]  %s34, 32, %s36, [#allocation6]
    $region9: #{tpu_custom_call.1} parent=1 // pred_fallthru
      _
    // Predicated region
    $region10: #{tpu_custom_call.1} parent=1 // pred_check
      _
    $region11: #{tpu_custom_call.1} parent=1 // pred_check_branch
      %40 = sbr.rel (0) target = $region13
    $region12: #{tpu_custom_call.1} parent=1 // pred_region
      %42 = vsyncadd [#allocation6], 0
      %s43 = sshll.u32 %s2, 4
      %s44 = int_to_ptr.hbm [resolvable:$true] %s43
      %s45 = sshll.u32 [#allocation7], 4
      %s46 = int_to_ptr.vmem [resolvable:$true] %s45
      %51 = dma.hbm_to_vmem [thread:$0]  %s44, 256, %s46, [#allocation6], 64, 64, 4
    $region13: #{tpu_custom_call.1} parent=1 // pred_fallthru
      _
    // Predicated region
    $region14: #{tpu_custom_call.1} parent=1 // pred_check
      _
    $region15: #{tpu_custom_call.1} parent=1 // pred_check_branch
      %53 = sbr.rel (0) target = $region17
    $region16: #{tpu_custom_call.1} parent=1 // pred_region
      %55 = vsyncadd [#allocation9], 0
      %s56 = sshll.u32 %s3, 4
      %s57 = int_to_ptr.hbm [resolvable:$true] %s56
      %s58 = sshll.u32 [#allocation8], 4
      %s59 = int_to_ptr.vmem [resolvable:$true] %s58
      %64 = dma.hbm_to_vmem [thread:$0]  %s57, 256, %s59, [#allocation9], 64, 64, 4
    $region17: #{tpu_custom_call.1} parent=1 // pred_fallthru
      _
    // Predicated region
    $region18: #{tpu_custom_call.1} parent=1 // pred_check
      _
    $region19: #{tpu_custom_call.1} parent=1 // pred_check_branch
      %66 = sbr.rel (0) target = $region21
    $region20: #{tpu_custom_call.1} parent=1 // pred_region
      _
    $region21: #{tpu_custom_call.1} parent=1 // pred_fallthru
      _
    // Predicated region
    $region22: #{tpu_custom_call.1} parent=1 // pred_check
      _
    $region23: #{tpu_custom_call.1} parent=1 // pred_check_branch
      %68 = sbr.rel (0) target = $region25
    $region24: #{tpu_custom_call.1} parent=1 // pred_region
      _
    $region25: #{tpu_custom_call.1} parent=1 // pred_fallthru
      _
    // Predicated region
    $region26: #{tpu_custom_call.1} parent=1 // pred_check
      _
    $region27: #{tpu_custom_call.1} parent=1 // pred_check_branch
      %70 = sbr.rel (0) target = $region29
    $region28: #{tpu_custom_call.1} parent=1 // pred_region
      %72 = dma.done [#allocation3], 256
    $region29: #{tpu_custom_call.1} parent=1 // pred_fallthru
      _
    // Predicated region
    $region30: #{tpu_custom_call.1} parent=1 // pred_check
      _
    $region31: #{tpu_custom_call.1} parent=1 // pred_check_branch
      %74 = sbr.rel (0) target = $region33
    $region32: #{tpu_custom_call.1} parent=1 // pred_region
      %76 = dma.done [#allocation6], 32
    $region33: #{tpu_custom_call.1} parent=1 // pred_fallthru
      _
    // Predicated region
    $region34: #{tpu_custom_call.1} parent=1 // pred_check
      _
    $region35: #{tpu_custom_call.1} parent=1 // pred_check_branch
      %78 = sbr.rel (0) target = $region37
    $region36: #{tpu_custom_call.1} parent=1 // pred_region
      %80 = dma.done [#allocation6], 256
    $region37: #{tpu_custom_call.1} parent=1 // pred_fallthru
      _
    // Predicated region
    $region38: #{tpu_custom_call.1} parent=1 // pred_check
      _
    $region39: #{tpu_custom_call.1} parent=1 // pred_check_branch
      %82 = sbr.rel (0) target = $region41
    $region40: #{tpu_custom_call.1} parent=1 // pred_region
      %84 = dma.done [#allocation9], 256
    $region41: #{tpu_custom_call.1} parent=1 // pred_fallthru
      _
    %v86 = vld [vmem:[#allocation2] sm:$0xff]
    %v87 = vld [vmem:[#allocation2 + $0x8] sm:$0xff]
    %v88 = vpack.c.bf16 %v87, %v86
    %v89 = vld [vmem:[#allocation8] sm:$0xf]
    %v90 = vld [vmem:[#allocation8 + $0x4] sm:$0xf]
    %v91 = vld [vmem:[#allocation8 + $0x8] sm:$0xf]
    %v92 = vld [vmem:[#allocation8 + $0xc] sm:$0xf]
    %v97 = vunpack.c.l.b16 %v89
    %v98 = vunpack.c.l.b16 %v90
    %v99 = vunpack.c.l.b16 %v91
    %v100 = vunpack.c.l.b16 %v92
    %v101 = vpack.c.b16 %v98, %v97
    %v102 = vpack.c.b16 %v100, %v99
    %vm105 = vcmask 261120
    %v107 = vsel %vm105, %v88, 0
    %109 = vmatpush.bf16.msra.mxu0 0
    %110 = vmatpush.bf16.msra.mxu0 0
    %111 = vmatpush.bf16.msra.mxu0 0
    %112 = vmatpush.bf16.msra.mxu0 0
    %113 = vmatpush.bf16.msra.mxu0 0
    %114 = vmatpush.bf16.msra.mxu0 0
    %115 = vmatpush.bf16.msra.mxu0 %v102
    %116 = vmatpush.bf16.msra.mxu0 %v101
    %117 = vmatmul.bf16.gmra.mxu0 %v107
    %v118 = vpop.f32.mrf.mxu0
    %v119 = vadd.f32 0.0, %v118
    %v120 = vpop.f32.mrf.mxu0
    %v121 = vadd.f32 0.0, %v120
    %122 = vdwg.mxu0
    %v123 = vld [vmem:[#allocation5] sm:$0x3]
    %v124 = vpack.c.bf16 %v123, %v123
    %v125 = vld [vmem:[#allocation7] sm:$0xf]
    %v126 = vld [vmem:[#allocation7 + $0x4] sm:$0xf]
    %v127 = vld [vmem:[#allocation7 + $0x8] sm:$0xf]
    %v128 = vld [vmem:[#allocation7 + $0xc] sm:$0xf]
    %v129 = vld [vmem:[%s4] sm:$0x1]
    %v131 = vperm.slane %v129, 0
    %v137 = vunpack.c.l.b16 %v125
    %v138 = vunpack.c.l.b16 %v126
    %v139 = vunpack.c.l.b16 %v127
    %v140 = vunpack.c.l.b16 %v128
    %v141 = vpack.c.b16 %v138, %v137
    %v142 = vpack.c.b16 %v140, %v139
    %v146 = vsel %vm105, %v124, 0
    %148 = vmatpush.bf16.msra.mxu0 0
    %149 = vmatpush.bf16.msra.mxu0 0
    %150 = vmatpush.bf16.msra.mxu0 0
    %151 = vmatpush.bf16.msra.mxu0 0
    %152 = vmatpush.bf16.msra.mxu0 0
    %153 = vmatpush.bf16.msra.mxu0 0
    %154 = vmatpush.bf16.msra.mxu0 %v142
    %155 = vmatpush.bf16.msra.mxu0 %v141
    %156 = vmatmul.bf16.gmra.mxu0 %v146
    %v157 = vpop.f32.mrf.mxu0
    %v158 = vadd.f32 %v131, %v157
    %v159 = vpop.f32.mrf.mxu0
    %160 = vdwg.mxu0
    %v162 = vrot.slane %v158, 1
    %v163 = vperm.slane %v158, 0
    %v164 = vperm.slane %v162, 0
    %v167 = vadd.f32 %v119, %v163
    %v168 = vadd.f32 %v121, %v164
    %v169 = vtanh.pop %v167
    %v170 = vtanh.pop %v168
    %v171 = vld [vmem:[%s5] sm:$0x1]
    %v173 = vperm.slane %v171, 0
    %v175 = vmul.f32 %v169, %v173
    %v176 = vmul.f32 %v170, %v173
    %v177 = vsel %vm105, %v175, 0.0
    %178 = vadd.xlane.f32.xlu0 %v177
    %v179 = vpop.xlane.xlu0 %178
    %v180 = vsel %vm105, %v176, 0.0
    %181 = vadd.xlane.f32.xlu0 %v180
    %v182 = vpop.xlane.xlu0 %181
    %v185 = vlaneseq
    %v186 = vand.u32 %v185, 127
    %v187 = vperm.slane %v179, %v186
    %v188 = vperm.slane %v182, %v186
    %vm189 = vcmask 1041409
    %v190 = vsel %vm189, %v188, %v187
    %vm192 = vcmask 58368
    %v193 = vsel %vm192, %v190, -inf
    %194 = vmax.xlane.f32.xlu0 %v193
    %v195 = vpop.xlane.xlu0 %194
    %v197 = vperm.slane %v195, 0
    %v198 = vperm.slane %v195, 1
    %v201 = vsub.f32 %v179, %v197
    %v202 = vsub.f32 %v182, %v198
    %v203 = vmul.f32 %v201, 1.442695
    %v204 = vpow.pop %v203
    %v205 = vmul.f32 %v202, 1.442695
    %v206 = vpow.pop %v205
    %209 = vset.pattern.permute.xlu0 0
    %210 = vperm.xlu0 %209, %v204
    %v211 = vpop.permute.xlu0 %210
    %212 = vset.pattern.permute.xlu0 0
    %213 = vperm.xlu0 %212, %v206
    %v214 = vpop.permute.xlu0 %213
    %v215 = vperm.slane %v211, %v186
    %v216 = vperm.slane %v214, %v186
    %v217 = vsel %vm189, %v216, %v215
    %v219 = vsel %vm192, %v217, 0.0
    %220 = vadd.xlane.f32.xlu0 %v219
    %v221 = vpop.xlane.xlu0 %220
    %v223 = vperm.slane %v221, 0
    %v224 = vperm.slane %v221, 1
    %v227 = vrcp.pop %v223
    %v228 = vmul.f32 %v223, %v227
    %v229 = vsub.f32 1.0, %v228
    %v230 = vmul.f32 %v227, %v229
    %v231 = vadd.f32 %v227, %v230
    %vm232 = vweird.f32 %v223
    %vm233 = vweird.f32 %v227
    %vm234 = vmor %vm232, %vm233
    %v235 = vsel %vm234, %v227, %v231
    %v236 = vand.u32 2147483647, %v223
    %vm237 = vcmp.eq.f32.partialorder %v236, 8.507059e+37
    %v238 = vand.u32 %v223, 2147483648
    %v239 = vor.u32 1.1754944e-38, %v238
    %v240 = vsel %vm237, %v239, %v235
    %v241 = vmul.f32 %v204, %v240
    %v242 = vrcp.pop %v224
    %v243 = vmul.f32 %v224, %v242
    %v244 = vsub.f32 1.0, %v243
    %v245 = vmul.f32 %v242, %v244
    %v246 = vadd.f32 %v242, %v245
    %vm247 = vweird.f32 %v224
    %vm248 = vweird.f32 %v242
    %vm249 = vmor %vm247, %vm248
    %v250 = vsel %vm249, %v242, %v246
    %v251 = vand.u32 2147483647, %v224
    %vm252 = vcmp.eq.f32.partialorder %v251, 8.507059e+37
    %v253 = vand.u32 %v224, 2147483648
    %v254 = vor.u32 1.1754944e-38, %v253
    %v255 = vsel %vm252, %v254, %v250
    %v256 = vmul.f32 %v206, %v255
    %258 = vset.pattern.permute.xlu0 0
    %259 = vperm.xlu0 %258, %v241
    %v260 = vpop.permute.xlu0 %259
    %263 = vset.pattern.permute.xlu0 0
    %264 = vperm.xlu0 %263, %v256
    %v265 = vpop.permute.xlu0 %264
    %v267 = vmul.f32 %v260, %v86
    %v268 = vmul.f32 %v265, %v87
    %v269 = vsel %vm105, %v267, 0.0
    %v270 = vrot.slane %v269, 4
    %v271 = vadd.f32 %v269, %v270
    %v272 = vrot.slane %v271, 2
    %v273 = vadd.f32 %v271, %v272
    %v274 = vrot.slane %v273, 1
    %v275 = vadd.f32 %v273, %v274
    %v276 = vsel %vm105, %v268, 0.0
    %v277 = vrot.slane %v276, 4
    %v278 = vadd.f32 %v276, %v277
    %v279 = vrot.slane %v278, 2
    %v280 = vadd.f32 %v278, %v279
    %v281 = vrot.slane %v280, 1
    %v282 = vadd.f32 %v280, %v281
    %v285 = vsel %vm189, %v282, %v275
    %vm287 = vcmask 254976
    %288 = vst.msk [vmem:[#allocation10] sm:$0x3] %vm287, %v285
    // Predicated region
    $region42: #{tpu_custom_call.1} parent=1 // pred_check
      _
    $region43: #{tpu_custom_call.1} parent=1 // pred_check_branch
      %290 = sbr.rel (0) target = $region45
    $region44: #{tpu_custom_call.1} parent=1 // pred_region
      %292 = vsyncadd [#allocation4], 0
      %s294 = sshll.u32 [#allocation10], 4
      %s295 = int_to_ptr.vmem [resolvable:$true] %s294
      %s296 = sshll.u32 %s6, 4
      %s297 = int_to_ptr.hbm [resolvable:$true] %s296
      %299 = dma.vmem_to_hbm [thread:$0]  %s295, 32, %s297, [#allocation4]
    $region45: #{tpu_custom_call.1} parent=1 // pred_fallthru
      _
    // Predicated region
    $region46: #{tpu_custom_call.1} parent=1 // pred_check
      _
    $region47: #{tpu_custom_call.1} parent=1 // pred_check_branch
      %301 = sbr.rel (0) target = $region49
    $region48: #{tpu_custom_call.1} parent=1 // pred_region
      %303 = dma.done [#allocation4], 32
    $region49: #{tpu_custom_call.1} parent=1 // pred_fallthru
      _
    %304 = vsyncpa [#allocation3], 1
    %305 = vsyncpa [#allocation6], 1
    %306 = vsyncpa [#allocation9], 1
    %307 = vsyncpa [#allocation4], 1

</llo_original>
